<compile_context>
chip_gen: v5e
topology: v5e:2x2
jax: 0.10.0
libtpu: 0.0.40
codegen_flags: <defaults>
</compile_context>

<pallas_src>
import jax
import jax.numpy as jnp
from jax.experimental import pallas as pl
from jax.experimental.pallas import tpu as pltpu

_LANE = 128
_SUBLANE = 8
_BLOCK_BUDGET_BYTES = 8 * 1024 * 1024   # per-block bytes for x / out tiles
_VMEM_LIMIT_BYTES = 48 * 1024 * 1024    # > v5e 16 MiB scoped default, < v7x 64 MiB physical


def _mean_drift_kernel(x_ref, noise_ref, o_ref):
    # x_ref: (tn, C_pad); noise_ref: (1, C_pad) broadcast over sublanes.
    o_ref[...] = x_ref[...] + noise_ref[...]


def _round_up(v, m):
    return (v + m - 1) // m * m


def add_row_noise(x, noise):
    """x: (N, C); noise: (1, C). Returns x + noise broadcast over all rows."""
    N, C = x.shape
    assert noise.shape == (1, C)

    itemsize = jnp.dtype(x.dtype).itemsize

    # Lane-dense output: pad channels to a multiple of 128 so stores are
    # unmasked vst (the biggest single lever for mem-bound kernels).
    C_pad = _round_up(C, _LANE)
    if C_pad != C:
        x = jnp.pad(x, ((0, 0), (0, C_pad - C)))
        noise = jnp.pad(noise, ((0, 0), (0, C_pad - C)))

    # Byte-budgeted row tile (multiple of 8 sublanes).  With ~8 MiB blocks,
    # double-buffered input + output is ~32 MiB — within the raised scoped
    # VMEM limit on all generations and under v7x's 64 MiB physical VMEM.
    row_bytes = C_pad * itemsize
    tn = max(_SUBLANE, (_BLOCK_BUDGET_BYTES // row_bytes) // _SUBLANE * _SUBLANE)
    if N <= tn:
        # Single block equal to the full array: no (8,128) divisibility issue,
        # no per-step pipeline overhead for small problems.
        tn = N
    grid_n = pl.cdiv(N, tn)   # ragged last block is masked by Pallas

    out = pl.pallas_call(
        _mean_drift_kernel,
        out_shape=jax.ShapeDtypeStruct((N, C_pad), x.dtype),
        grid_spec=pltpu.PrefetchScalarGridSpec(
            num_scalar_prefetch=0,
            grid=(grid_n,),
            in_specs=[
                pl.BlockSpec((tn, C_pad), lambda i: (i, 0)),
                pl.BlockSpec((1, C_pad), lambda i: (0, 0)),  # resident noise block
            ],
            out_specs=pl.BlockSpec((tn, C_pad), lambda i: (i, 0)),
        ),
        compiler_params=pltpu.CompilerParams(
            # Rows are independent: shard blocks across both v7x TensorCores.
            dimension_semantics=("parallel",),
            vmem_limit_bytes=_VMEM_LIMIT_BYTES,
        ),
        cost_estimate=pl.CostEstimate(
            flops=N * C_pad,
            transcendentals=0,
            bytes_accessed=(2 * N + 1) * C_pad * itemsize,
        ),
    )(x, noise)

    if C_pad != C:
        out = out[:, :C]
    return out


def mean_drift_noise(x, key, std=0.1):
    """Module-equivalent forward: x + randn(1, C) * std."""
    _, C = x.shape
    # Draw in f32, scale, then cast to x.dtype (matches torch's f32 randn).
    # TODO(synk): torch.randn's exact RNG stream is not reproducible in JAX.
    noise = (jax.random.normal(key, (1, C), dtype=jnp.float32)
             * jnp.float32(std)).astype(x.dtype)
    return add_row_noise(x, noise)


if __name__ == "__main__":
    # Small shapes consistent with the module: (rows, neural channels).
    N, C = 16, 256
    STD = 0.1

    key = jax.random.PRNGKey(0)
    kx, kn = jax.random.split(key)
    x = jax.random.normal(kx, (N, C), dtype=jnp.float32)

    out = jax.block_until_ready(mean_drift_noise(x, kn, std=STD))

    # Pure-JAX reference: same key -> same noise vector.
    noise_ref = jax.random.normal(kn, (1, C), dtype=jnp.float32) * STD
    ref = x + noise_ref

    assert out.shape == (N, C)
    assert jnp.allclose(out, ref, atol=1e-6, rtol=1e-6)

    print("KERNEL_OK")
</pallas_src>

<mosaic_0001>
module attributes {stable_mosaic.version = 11 : i64} {
  func.func @_mean_drift_kernel(%arg0: i32, %arg1: memref<16x256xf32, #tpu.memory_space<vmem>>, %arg2: memref<1x256xf32, #tpu.memory_space<vmem>>, %arg3: memref<16x256xf32, #tpu.memory_space<vmem>>) attributes {dimension_semantics = [#tpu.dimension_semantics<parallel>], iteration_bounds = array<i64: 1>, scalar_prefetch = 0 : i64, scratch_operands = 0 : i64, tpu.core_type = #tpu.core_type<tc>, window_params = [{transform_indices = @transform_0, window_bounds = array<i64: 16, 256>}, {pipeline_mode = #tpu.pipeline_mode<synchronous>, transform_indices = @transform_1, window_bounds = array<i64: 1, 256>}, {transform_indices = @transform_2, window_bounds = array<i64: 16, 256>}]} {
    %c0 = arith.constant 0 : index
    %c0_0 = arith.constant 0 : index
    %0 = vector.load %arg1[%c0, %c0_0] : memref<16x256xf32, #tpu.memory_space<vmem>>, vector<16x256xf32>
    %c0_1 = arith.constant 0 : index
    %c0_2 = arith.constant 0 : index
    %1 = vector.load %arg2[%c0_1, %c0_2] : memref<1x256xf32, #tpu.memory_space<vmem>>, vector<1x256xf32>
    %2 = vector.broadcast %1 : vector<1x256xf32> to vector<16x256xf32>
    %3 = arith.addf %0, %2 : vector<16x256xf32>
    %c0_3 = arith.constant 0 : index
    %c0_4 = arith.constant 0 : index
    %4 = vector.load %arg3[%c0_3, %c0_4] : memref<16x256xf32, #tpu.memory_space<vmem>>, vector<16x256xf32>
    tpu.vector_store %arg3[%c0_3, %c0_4], %3 {strides = array<i32>} : memref<16x256xf32, #tpu.memory_space<vmem>>, vector<16x256xf32>,
    return
  }
  func.func @transform_0(%arg0: i32) -> (i32, i32) {
    %c0_i32 = arith.constant 0 : i32
    %c0_i32_0 = arith.constant 0 : i32
    return %arg0, %c0_i32 : i32, i32
  }
  func.func @transform_1(%arg0: i32) -> (i32, i32) {
    %c0_i32 = arith.constant 0 : i32
    %c0_i32_0 = arith.constant 0 : i32
    %c0_i32_1 = arith.constant 0 : i32
    return %c0_i32, %c0_i32_0 : i32, i32
  }
  func.func @transform_2(%arg0: i32) -> (i32, i32) {
    %c0_i32 = arith.constant 0 : i32
    %c0_i32_0 = arith.constant 0 : i32
    return %arg0, %c0_i32 : i32, i32
  }
}

</mosaic_0001>

<llo_original>
// kernel: tpu_custom_call.1
$region0: #{tpu_custom_call.1}
  #allocation0 [shape = 'u32[]', space=smem, size = 0x4, offset = 0x4, fixed_abs, tag = 'smem constant byte address 0x4 - core index']
  #allocation1 [shape = 'u32[72,128]{1,0:T(1,128)}', space=vmem, size = 0x9000, scoped, tag = 'internal scratch']
  %s0 = inlined_call_operand.hbm [shape: f32[16,256], index: 0, kind: input, shape index: {}]
  %s1 = inlined_call_operand.hbm [shape: f32[1,256], index: 1, kind: input, shape index: {}]
  %s2 = inlined_call_operand.hbm [shape: f32[16,256], index: 2, kind: output, shape index: {}]
  %s3 = sld [smem:[#allocation0]]
  $region26: #{tpu_custom_call.1} parent=0
    _
  %s5 = ssub.s32 1, %s3
  %s6 = scalar_select 0, %s5, %s3
  $region1: #{tpu_custom_call.1} parent=0
    #allocation2 [shape = 'u8[16384]{0}', space=vmem, size = 0x4000, scoped, tag = 'input window, operand 0, single buffered']
    #allocation3 [shape = 's32[1]{0}', space=sflag, size = 0x4, scoped, tag = 'scoped memory for tpu_custom_call.1']
    #allocation4 [shape = 's32[1]{0}', space=sflag, size = 0x4, scoped, tag = 'scoped memory for tpu_custom_call.1']
    #allocation5 [shape = 'u8[1024]{0}', space=vmem, size = 0x400, scoped, tag = 'input window, operand 1, single buffered']
    #allocation6 [shape = 's32[1]{0}', space=sflag, size = 0x4, scoped, tag = 'scoped memory for tpu_custom_call.1']
    #allocation7 [shape = 'u8[16384]{0}', space=vmem, size = 0x4000, scoped, tag = 'output window, operand 0, single buffered']
    %7 = vsyncpa [#allocation3], 0
    %8 = vsyncpa [#allocation6], 0
    %9 = vsyncpa [#allocation4], 0
    // Predicated region
    $region2: #{tpu_custom_call.1} parent=1 // pred_check
      _
    $region3: #{tpu_custom_call.1} parent=1 // pred_check_branch
      %11 = sbr.rel (0) target = $region5
    $region4: #{tpu_custom_call.1} parent=1 // pred_region
      %13 = vsyncadd [#allocation3], 0
      %s14 = sshll.u32 %s0, 4
      %s15 = int_to_ptr.hbm [resolvable:$true] %s14
      %s16 = sshll.u32 [#allocation2], 4
      %s17 = int_to_ptr.vmem [resolvable:$true] %s16
      %22 = dma.hbm_to_vmem [thread:$0]  %s15, 512, %s17, [#allocation3], 256, 256, 16
    $region5: #{tpu_custom_call.1} parent=1 // pred_fallthru
      _
    // Predicated region
    $region6: #{tpu_custom_call.1} parent=1 // pred_check
      _
    $region7: #{tpu_custom_call.1} parent=1 // pred_check_branch
      %24 = sbr.rel (0) target = $region9
    $region8: #{tpu_custom_call.1} parent=1 // pred_region
      %26 = vsyncadd [#allocation6], 0
      %s28 = sshll.u32 %s1, 4
      %s29 = int_to_ptr.hbm [resolvable:$true] %s28
      %s30 = sshll.u32 [#allocation5], 4
      %s31 = int_to_ptr.vmem [resolvable:$true] %s30
      %33 = dma.hbm_to_vmem [thread:$0]  %s29, 32, %s31, [#allocation6]
    $region9: #{tpu_custom_call.1} parent=1 // pred_fallthru
      _
    // Predicated region
    $region10: #{tpu_custom_call.1} parent=1 // pred_check
      _
    $region11: #{tpu_custom_call.1} parent=1 // pred_check_branch
      %35 = sbr.rel (0) target = $region13
    $region12: #{tpu_custom_call.1} parent=1 // pred_region
      %37 = dma.done [#allocation3], 512
    $region13: #{tpu_custom_call.1} parent=1 // pred_fallthru
      _
    // Predicated region
    $region14: #{tpu_custom_call.1} parent=1 // pred_check
      _
    $region15: #{tpu_custom_call.1} parent=1 // pred_check_branch
      %39 = sbr.rel (0) target = $region17
    $region16: #{tpu_custom_call.1} parent=1 // pred_region
      %41 = dma.done [#allocation6], 32
    $region17: #{tpu_custom_call.1} parent=1 // pred_fallthru
      _
    %v42 = vld [vmem:[#allocation2] sm:$0xff]
    %v43 = vld [vmem:[#allocation2 + $0x8] sm:$0xff]
    %v44 = vld [vmem:[#allocation2 + $0x10] sm:$0xff]
    %v45 = vld [vmem:[#allocation2 + $0x18] sm:$0xff]
    %v46 = vld [vmem:[#allocation5] sm:$0x3]
    %v48 = vperm.slane %v46, 0
    %v49 = vperm.slane %v46, 1
    %v52 = vadd.f32 %v42, %v48
    %v53 = vadd.f32 %v43, %v49
    %v54 = vadd.f32 %v44, %v48
    %v55 = vadd.f32 %v45, %v49
    %56 = vst [vmem:[#allocation7] sm:$0xff] %v52
    %57 = vst [vmem:[#allocation7 + $0x8] sm:$0xff] %v53
    %58 = vst [vmem:[#allocation7 + $0x10] sm:$0xff] %v54
    %59 = vst [vmem:[#allocation7 + $0x18] sm:$0xff] %v55
    // Predicated region
    $region18: #{tpu_custom_call.1} parent=1 // pred_check
      _
    $region19: #{tpu_custom_call.1} parent=1 // pred_check_branch
      %61 = sbr.rel (0) target = $region21
    $region20: #{tpu_custom_call.1} parent=1 // pred_region
      %63 = vsyncadd [#allocation4], 0
      %s64 = sshll.u32 [#allocation7], 4
      %s65 = int_to_ptr.vmem [resolvable:$true] %s64
      %s66 = sshll.u32 %s2, 4
      %s67 = int_to_ptr.hbm [resolvable:$true] %s66
      %72 = dma.vmem_to_hbm [thread:$0]  %s65, 512, %s67, [#allocation4], 256, 256, 16
    $region21: #{tpu_custom_call.1} parent=1 // pred_fallthru
      _
    // Predicated region
    $region22: #{tpu_custom_call.1} parent=1 // pred_check
      _
    $region23: #{tpu_custom_call.1} parent=1 // pred_check_branch
      %74 = sbr.rel (0) target = $region25
    $region24: #{tpu_custom_call.1} parent=1 // pred_region
      %76 = dma.done [#allocation4], 512
    $region25: #{tpu_custom_call.1} parent=1 // pred_fallthru
      _
    %77 = vsyncpa [#allocation3], 1
    %78 = vsyncpa [#allocation6], 1
    %79 = vsyncpa [#allocation4], 1

</llo_original>
